<compile_context>
chip_gen: v6e
topology: v6e:2x2x1
jax: 0.10.0
libtpu: 0.0.40
codegen_flags: <defaults>
</compile_context>

<pallas_src>
import functools

import jax
import jax.numpy as jnp
from jax.experimental import pallas as pl
from jax.experimental.pallas import tpu as pltpu


def _round_up(x, m):
    return ((x + m - 1) // m) * m


def _tree_sum_points(x, P, C):
    """x: (TN, P*C) -> (TN, C); sums the P groups of C lanes with a lane tree-fold."""
    width = P
    # Halve while even: log2 folds, each one lane-shift + one add per vreg.
    while width > 1 and width % 2 == 0:
        half = width // 2
        x = x[:, : half * C] + x[:, half * C:]
        width = half
    # Remainder (only if P has an odd factor): plain slice-accumulate.
    acc = x[:, :C]
    for p in range(1, width):
        acc = acc + x[:, p * C:(p + 1) * C]
    return acc


def _voxel_mean_kernel(feat_ref, nv_ref, out_ref, *, P, C):
    # feat_ref: (TN, P*C)  nv_ref: (TN, 1) f32  out_ref: (TN, C)
    feats = feat_ref[...].astype(jnp.float32)
    summed = _tree_sum_points(feats, P, C)            # (TN, C)
    # Exact divide (keeps 1e-5 parity with the PyTorch reference).
    out_ref[...] = (summed / nv_ref[...]).astype(out_ref.dtype)


def voxel_feature_extractor_v3(features, num_voxels, num_input_features=4, tile_n=2048):
    """features: [N, P, C] float, num_voxels: [N] int -> [N, C] float (mean over points)."""
    N, P, C = features.shape
    assert C == num_input_features

    # Flatten (P, C) into the lane axis: contiguous reshape, no HBM data movement.
    feat2d = features.reshape(N, P * C)
    # type_as(features) in PyTorch: cast counts to float for the divide.
    nv = num_voxels.astype(jnp.float32).reshape(N, 1)

    # Choose a voxel tile: multiple of 8 sublanes, no bigger than (padded) N.
    tile_n = max(8, min(_round_up(tile_n, 8), _round_up(N, 8)))
    Np = _round_up(N, tile_n)
    if Np != N:
        pad = Np - N
        # Padded voxels: zero features, count=1 (avoids div-by-zero; rows are discarded).
        feat2d = jnp.pad(feat2d, ((0, pad), (0, 0)))
        nv = jnp.pad(nv, ((0, pad), (0, 0)), constant_values=1.0)

    grid = (Np // tile_n,)
    out = pl.pallas_call(
        functools.partial(_voxel_mean_kernel, P=P, C=C),
        out_shape=jax.ShapeDtypeStruct((Np, C), features.dtype),
        grid_spec=pltpu.PrefetchScalarGridSpec(
            num_scalar_prefetch=0,
            grid=grid,
            in_specs=[
                pl.BlockSpec((tile_n, P * C), lambda i: (i, 0)),
                pl.BlockSpec((tile_n, 1), lambda i: (i, 0)),
            ],
            out_specs=pl.BlockSpec((tile_n, C), lambda i: (i, 0)),
        ),
        compiler_params=pltpu.CompilerParams(
            dimension_semantics=("parallel",),   # megacore-shardable on v7x
            vmem_limit_bytes=32 * 1024 * 1024,   # <= physical on v5e/v6e/v7x
        ),
    )(feat2d, nv)
    return out[:N]


def _reference(features, num_voxels):
    return features.sum(axis=1) / num_voxels.astype(features.dtype)[:, None]


def _make_inputs(key, N, P, C):
    k_feat, k_cnt = jax.random.split(key)
    num_voxels = jax.random.randint(k_cnt, (N,), minval=1, maxval=P + 1, dtype=jnp.int32)
    raw = jax.random.normal(k_feat, (N, P, C), dtype=jnp.float32)
    point_idx = jnp.arange(P)[None, :, None]                 # (1, P, 1)
    valid_mask = point_idx < num_voxels[:, None, None]       # (N, P, 1)
    features = jnp.where(valid_mask, raw, 0.0)               # zero-padded voxelizer output
    return features, num_voxels


if __name__ == "__main__":
    key = jax.random.PRNGKey(0)
    k1, k2 = jax.random.split(key)

    # Small primary case (single grid step after tile clamping).
    N, P, C = 64, 8, 4
    features, num_voxels = _make_inputs(k1, N, P, C)
    out = voxel_feature_extractor_v3(features, num_voxels, num_input_features=C)
    out = jax.block_until_ready(out)
    ref = _reference(features, num_voxels)
    assert out.shape == (N, C)
    assert jnp.allclose(out, ref, atol=1e-5, rtol=1e-5), "mismatch vs reference (N=64)"

    # Secondary case exercising multi-step grid + N-padding (N not a multiple of tile_n).
    N2 = 200
    features2, num_voxels2 = _make_inputs(k2, N2, P, C)
    out2 = voxel_feature_extractor_v3(features2, num_voxels2, num_input_features=C, tile_n=64)
    out2 = jax.block_until_ready(out2)
    ref2 = _reference(features2, num_voxels2)
    assert out2.shape == (N2, C)
    assert jnp.allclose(out2, ref2, atol=1e-5, rtol=1e-5), "mismatch vs reference (N=200)"

    print("KERNEL_OK")
</pallas_src>

<mosaic_0001>
module attributes {stable_mosaic.version = 11 : i64} {
  func.func @_voxel_mean_kernel(%arg0: i32, %arg1: memref<64x32xf32, #tpu.memory_space<vmem>>, %arg2: memref<64x1xf32, #tpu.memory_space<vmem>>, %arg3: memref<64x4xf32, #tpu.memory_space<vmem>>) attributes {dimension_semantics = [#tpu.dimension_semantics<parallel>], iteration_bounds = array<i64: 1>, scalar_prefetch = 0 : i64, scratch_operands = 0 : i64, tpu.core_type = #tpu.core_type<tc>, window_params = [{transform_indices = @transform_0, window_bounds = array<i64: 64, 32>}, {transform_indices = @transform_1, window_bounds = array<i64: 64, 1>}, {transform_indices = @transform_2, window_bounds = array<i64: 64, 4>}]} {
    %c0 = arith.constant 0 : index
    %c0_0 = arith.constant 0 : index
    %0 = vector.load %arg1[%c0, %c0_0] : memref<64x32xf32, #tpu.memory_space<vmem>>, vector<64x32xf32>
    %1 = vector.extract_strided_slice %0 {offsets = [0, 0], sizes = [64, 16], strides = [1, 1]} : vector<64x32xf32> to vector<64x16xf32>
    %2 = vector.extract_strided_slice %0 {offsets = [0, 16], sizes = [64, 16], strides = [1, 1]} : vector<64x32xf32> to vector<64x16xf32>
    %3 = arith.addf %1, %2 : vector<64x16xf32>
    %4 = vector.extract_strided_slice %3 {offsets = [0, 0], sizes = [64, 8], strides = [1, 1]} : vector<64x16xf32> to vector<64x8xf32>
    %5 = vector.extract_strided_slice %3 {offsets = [0, 8], sizes = [64, 8], strides = [1, 1]} : vector<64x16xf32> to vector<64x8xf32>
    %6 = arith.addf %4, %5 : vector<64x8xf32>
    %7 = vector.extract_strided_slice %6 {offsets = [0, 0], sizes = [64, 4], strides = [1, 1]} : vector<64x8xf32> to vector<64x4xf32>
    %8 = vector.extract_strided_slice %6 {offsets = [0, 4], sizes = [64, 4], strides = [1, 1]} : vector<64x8xf32> to vector<64x4xf32>
    %9 = arith.addf %7, %8 : vector<64x4xf32>
    %c0_1 = arith.constant 0 : index
    %c0_2 = arith.constant 0 : index
    %10 = vector.load %arg2[%c0_1, %c0_2] : memref<64x1xf32, #tpu.memory_space<vmem>>, vector<64x1xf32>
    %11 = vector.broadcast %10 : vector<64x1xf32> to vector<64x4xf32>
    %12 = arith.divf %9, %11 : vector<64x4xf32>
    %c0_3 = arith.constant 0 : index
    %c0_4 = arith.constant 0 : index
    %13 = vector.load %arg3[%c0_3, %c0_4] : memref<64x4xf32, #tpu.memory_space<vmem>>, vector<64x4xf32>
    tpu.vector_store %arg3[%c0_3, %c0_4], %12 {strides = array<i32>} : memref<64x4xf32, #tpu.memory_space<vmem>>, vector<64x4xf32>,
    return
  }
  func.func @transform_0(%arg0: i32) -> (i32, i32) {
    %c0_i32 = arith.constant 0 : i32
    %c0_i32_0 = arith.constant 0 : i32
    return %arg0, %c0_i32 : i32, i32
  }
  func.func @transform_1(%arg0: i32) -> (i32, i32) {
    %c0_i32 = arith.constant 0 : i32
    %c0_i32_0 = arith.constant 0 : i32
    return %arg0, %c0_i32 : i32, i32
  }
  func.func @transform_2(%arg0: i32) -> (i32, i32) {
    %c0_i32 = arith.constant 0 : i32
    %c0_i32_0 = arith.constant 0 : i32
    return %arg0, %c0_i32 : i32, i32
  }
}

</mosaic_0001>

<llo_original>
// kernel: tpu_custom_call.1
$region0: #{tpu_custom_call.1}
  #allocation0 [shape = 'u32[]', space=smem, size = 0x4, offset = 0x4, fixed_abs, tag = 'smem constant byte address 0x4 - core index']
  #allocation1 [shape = 'u32[144,128]{1,0:T(1,128)}', space=vmem, size = 0x12000, scoped, tag = 'internal scratch']
  %s0 = inlined_call_operand.vmem [shape: f32[64,32], index: 0, kind: input, shape index: {}]
  %s1 = inlined_call_operand.vmem [shape: f32[64,1], index: 1, kind: input, shape index: {}]
  %s2 = inlined_call_operand.vmem [shape: f32[64,4], index: 2, kind: output, shape index: {}]
  %s3 = sld [smem:[#allocation0]]
  $region18: #{tpu_custom_call.1} parent=0
    _
  %s5 = ssub.s32 1, %s3
  %s6 = scalar_select 0, %s5, %s3
  // Predicated region
  $region2: #{tpu_custom_call.1} parent=0 // pred_check
    _
  $region3: #{tpu_custom_call.1} parent=0 // pred_check_branch
    %8 = sbr.rel (0) target = $region5
  $region4: #{tpu_custom_call.1} parent=0 // pred_region
    _
  $region5: #{tpu_custom_call.1} parent=0 // pred_fallthru
    _
  // Predicated region
  $region6: #{tpu_custom_call.1} parent=0 // pred_check
    _
  $region7: #{tpu_custom_call.1} parent=0 // pred_check_branch
    %10 = sbr.rel (0) target = $region9
  $region8: #{tpu_custom_call.1} parent=0 // pred_region
    _
  $region9: #{tpu_custom_call.1} parent=0 // pred_fallthru
    _
  %v11 = vld [vmem:[%s0] sm:$0xff]
  %v12 = vld [vmem:[%s0 + $0x8] sm:$0xff]
  %v13 = vld [vmem:[%s0 + $0x10] sm:$0xff]
  %v14 = vld [vmem:[%s0 + $0x18] sm:$0xff]
  %v15 = vld [vmem:[%s0 + $0x20] sm:$0xff]
  %v16 = vld [vmem:[%s0 + $0x28] sm:$0xff]
  %v17 = vld [vmem:[%s0 + $0x30] sm:$0xff]
  %v18 = vld [vmem:[%s0 + $0x38] sm:$0xff]
  %27 = vrot.lane.b32.xlu0 %v11, 112
  %v28 = vpop.permute.xlu0 %27
  %29 = vrot.lane.b32.xlu0 %v12, 112
  %v30 = vpop.permute.xlu0 %29
  %31 = vrot.lane.b32.xlu0 %v13, 112
  %v32 = vpop.permute.xlu0 %31
  %33 = vrot.lane.b32.xlu0 %v14, 112
  %v34 = vpop.permute.xlu0 %33
  %35 = vrot.lane.b32.xlu0 %v15, 112
  %v36 = vpop.permute.xlu0 %35
  %37 = vrot.lane.b32.xlu0 %v16, 112
  %v38 = vpop.permute.xlu0 %37
  %39 = vrot.lane.b32.xlu0 %v17, 112
  %v40 = vpop.permute.xlu0 %39
  %41 = vrot.lane.b32.xlu0 %v18, 112
  %v42 = vpop.permute.xlu0 %41
  %v51 = vadd.f32 %v11, %v28
  %v52 = vadd.f32 %v12, %v30
  %v53 = vadd.f32 %v13, %v32
  %v54 = vadd.f32 %v14, %v34
  %v55 = vadd.f32 %v15, %v36
  %v56 = vadd.f32 %v16, %v38
  %v57 = vadd.f32 %v17, %v40
  %v58 = vadd.f32 %v18, %v42
  %67 = vrot.lane.b32.xlu0 %v51, 120
  %v68 = vpop.permute.xlu0 %67
  %69 = vrot.lane.b32.xlu0 %v52, 120
  %v70 = vpop.permute.xlu0 %69
  %71 = vrot.lane.b32.xlu0 %v53, 120
  %v72 = vpop.permute.xlu0 %71
  %73 = vrot.lane.b32.xlu0 %v54, 120
  %v74 = vpop.permute.xlu0 %73
  %75 = vrot.lane.b32.xlu0 %v55, 120
  %v76 = vpop.permute.xlu0 %75
  %77 = vrot.lane.b32.xlu0 %v56, 120
  %v78 = vpop.permute.xlu0 %77
  %79 = vrot.lane.b32.xlu0 %v57, 120
  %v80 = vpop.permute.xlu0 %79
  %81 = vrot.lane.b32.xlu0 %v58, 120
  %v82 = vpop.permute.xlu0 %81
  %v91 = vadd.f32 %v51, %v68
  %v92 = vadd.f32 %v52, %v70
  %v93 = vadd.f32 %v53, %v72
  %v94 = vadd.f32 %v54, %v74
  %v95 = vadd.f32 %v55, %v76
  %v96 = vadd.f32 %v56, %v78
  %v97 = vadd.f32 %v57, %v80
  %v98 = vadd.f32 %v58, %v82
  %107 = vrot.lane.b32.xlu0 %v91, 124
  %v108 = vpop.permute.xlu0 %107
  %109 = vrot.lane.b32.xlu0 %v92, 124
  %v110 = vpop.permute.xlu0 %109
  %111 = vrot.lane.b32.xlu0 %v93, 124
  %v112 = vpop.permute.xlu0 %111
  %113 = vrot.lane.b32.xlu0 %v94, 124
  %v114 = vpop.permute.xlu0 %113
  %115 = vrot.lane.b32.xlu0 %v95, 124
  %v116 = vpop.permute.xlu0 %115
  %117 = vrot.lane.b32.xlu0 %v96, 124
  %v118 = vpop.permute.xlu0 %117
  %119 = vrot.lane.b32.xlu0 %v97, 124
  %v120 = vpop.permute.xlu0 %119
  %121 = vrot.lane.b32.xlu0 %v98, 124
  %v122 = vpop.permute.xlu0 %121
  %v131 = vadd.f32 %v91, %v108
  %v132 = vadd.f32 %v92, %v110
  %v133 = vadd.f32 %v93, %v112
  %v134 = vadd.f32 %v94, %v114
  %v135 = vadd.f32 %v95, %v116
  %v136 = vadd.f32 %v96, %v118
  %v137 = vadd.f32 %v97, %v120
  %v138 = vadd.f32 %v98, %v122
  %v139 = vld [vmem:[%s1] sm:$0xff]
  %v140 = vld [vmem:[%s1 + $0x8] sm:$0xff]
  %v141 = vld [vmem:[%s1 + $0x10] sm:$0xff]
  %v142 = vld [vmem:[%s1 + $0x18] sm:$0xff]
  %v143 = vld [vmem:[%s1 + $0x20] sm:$0xff]
  %v144 = vld [vmem:[%s1 + $0x28] sm:$0xff]
  %v145 = vld [vmem:[%s1 + $0x30] sm:$0xff]
  %v146 = vld [vmem:[%s1 + $0x38] sm:$0xff]
  %148 = vset.pattern.permute.xlu0 0
  %149 = vperm.xlu0 %148, %v139
  %v150 = vpop.permute.xlu0 %149
  %153 = vset.pattern.permute.xlu0 0
  %154 = vperm.xlu0 %153, %v140
  %v155 = vpop.permute.xlu0 %154
  %158 = vset.pattern.permute.xlu0 0
  %159 = vperm.xlu0 %158, %v141
  %v160 = vpop.permute.xlu0 %159
  %163 = vset.pattern.permute.xlu0 0
  %164 = vperm.xlu0 %163, %v142
  %v165 = vpop.permute.xlu0 %164
  %168 = vset.pattern.permute.xlu0 0
  %169 = vperm.xlu0 %168, %v143
  %v170 = vpop.permute.xlu0 %169
  %173 = vset.pattern.permute.xlu0 0
  %174 = vperm.xlu0 %173, %v144
  %v175 = vpop.permute.xlu0 %174
  %178 = vset.pattern.permute.xlu0 0
  %179 = vperm.xlu0 %178, %v145
  %v180 = vpop.permute.xlu0 %179
  %183 = vset.pattern.permute.xlu0 0
  %184 = vperm.xlu0 %183, %v146
  %v185 = vpop.permute.xlu0 %184
  %v187 = vrcp.pop %v150
  %v188 = vmul.f32 %v131, %v187
  %v189 = vrcp.pop %v155
  %v190 = vmul.f32 %v132, %v189
  %v191 = vrcp.pop %v160
  %v192 = vmul.f32 %v133, %v191
  %v193 = vrcp.pop %v165
  %v194 = vmul.f32 %v134, %v193
  %v195 = vrcp.pop %v170
  %v196 = vmul.f32 %v135, %v195
  %v197 = vrcp.pop %v175
  %v198 = vmul.f32 %v136, %v197
  %v199 = vrcp.pop %v180
  %v200 = vmul.f32 %v137, %v199
  %v201 = vrcp.pop %v185
  %v202 = vmul.f32 %v138, %v201
  %vm203 = vcmask 31744
  %204 = vst.msk [vmem:[%s2] sm:$0xff] %vm203, %v188
  %205 = vst.msk [vmem:[%s2 + $0x8] sm:$0xff] %vm203, %v190
  %206 = vst.msk [vmem:[%s2 + $0x10] sm:$0xff] %vm203, %v192
  %207 = vst.msk [vmem:[%s2 + $0x18] sm:$0xff] %vm203, %v194
  %208 = vst.msk [vmem:[%s2 + $0x20] sm:$0xff] %vm203, %v196
  %209 = vst.msk [vmem:[%s2 + $0x28] sm:$0xff] %vm203, %v198
  %210 = vst.msk [vmem:[%s2 + $0x30] sm:$0xff] %vm203, %v200
  %211 = vst.msk [vmem:[%s2 + $0x38] sm:$0xff] %vm203, %v202
  // Predicated region
  $region10: #{tpu_custom_call.1} parent=0 // pred_check
    _
  $region11: #{tpu_custom_call.1} parent=0 // pred_check_branch
    %213 = sbr.rel (0) target = $region13
  $region12: #{tpu_custom_call.1} parent=0 // pred_region
    _
  $region13: #{tpu_custom_call.1} parent=0 // pred_fallthru
    _
  // Predicated region
  $region14: #{tpu_custom_call.1} parent=0 // pred_check
    _
  $region15: #{tpu_custom_call.1} parent=0 // pred_check_branch
    %215 = sbr.rel (0) target = $region17
  $region16: #{tpu_custom_call.1} parent=0 // pred_region
    _
  $region17: #{tpu_custom_call.1} parent=0 // pred_fallthru
    _

</llo_original>
